<compile_context>
chip_gen: v5e
topology: v5e:2x2
jax: 0.10.0
libtpu: 0.0.40
codegen_flags: <defaults>
</compile_context>

<pallas_src>
import jax
import jax.numpy as jnp
from jax.experimental import pallas as pl
from jax.experimental.pallas import tpu as pltpu

EPS = 1e-5

# Per-block DMA target (~4 MiB): big enough to amortize the ~0.35 us
# per-grid-step overhead, small enough that double-buffered input + output
# blocks plus f32 temporaries stay well under v7x's 64 MiB VMEM
# (v5e/v6e have 128 MiB).
_DEFAULT_TARGET_BLOCK_BYTES = 4 * 1024 * 1024
_VMEM_LIMIT_CAP = 56 * 1024 * 1024      # stay under v7x physical VMEM (64 MiB)
_VMEM_LIMIT_FLOOR = 32 * 1024 * 1024


def _cdiv(a, b):
    return (a + b - 1) // b


def _round_up(n, m):
    return _cdiv(n, m) * m


def _ln_over_f_kernel(x_ref, o_ref):
    # x_ref block: (1, tC, F, tT); LayerNorm reduction over axis 2 (F).
    x = x_ref[...].astype(jnp.float32)
    mean = jnp.mean(x, axis=2, keepdims=True)
    centered = x - mean
    var = jnp.mean(centered * centered, axis=2, keepdims=True)  # biased variance
    inv = jax.lax.rsqrt(var + EPS)
    o_ref[...] = (centered * inv).astype(o_ref.dtype)


def _ln_over_f_affine_kernel(x_ref, w_ref, b_ref, o_ref):
    # Same as above, plus per-F affine fused into the normalization scalar.
    x = x_ref[...].astype(jnp.float32)
    w = w_ref[...].astype(jnp.float32)          # (1, 1, F, 1)
    b = b_ref[...].astype(jnp.float32)          # (1, 1, F, 1)
    mean = jnp.mean(x, axis=2, keepdims=True)
    centered = x - mean
    var = jnp.mean(centered * centered, axis=2, keepdims=True)
    inv = jax.lax.rsqrt(var + EPS)
    o_ref[...] = (centered * (inv * w) + b).astype(o_ref.dtype)


def _pick_tiles(B, C, F, T, itemsize, target_block_bytes):
    """Choose (tC, tT) so one block is ~target_block_bytes.

    Prefers spanning the full (F, T) plane (fully contiguous in HBM) and
    folding several C values into the block; falls back to lane-dense T tiling
    (multiples of 128) when a single (F, T) plane already exceeds the target.
    Ragged edges (C % tC != 0, T % tT != 0) are handled by Pallas' automatic
    edge-block masking — no wrapper-side pad/slice required.
    """
    slab = F * T * itemsize                      # one contiguous (F, T) plane
    if slab <= target_block_bytes:
        tT = T                                   # full T extent
        tC = max(1, min(C, target_block_bytes // slab))
    else:
        tC = 1
        tT = max(128, (target_block_bytes // (F * itemsize)) // 128 * 128)
        tT = min(tT, _round_up(T, 128))

    # Keep enough grid steps for pipeline warmup and for v7x's two TensorCores
    # to load-balance — only matters when the tensor is large enough to care.
    total_bytes = B * C * F * T * itemsize
    if total_bytes >= 8 * target_block_bytes:
        while tC > 1 and B * _cdiv(C, tC) * _cdiv(T, tT) < 8:
            tC = max(1, tC // 2)
    return tC, tT


def normalize(x, weight=None, bias=None, *,
              target_block_bytes=_DEFAULT_TARGET_BLOCK_BYTES):
    """LayerNorm over axis 2 of x: (B, C, F, T).

    Matches the PyTorch module: transpose(2,3) -> LayerNorm(F) -> transpose
    back, with a freshly constructed (identity-affine) LayerNorm. Optional
    per-F weight/bias are supported for generality; pass None to match the
    reference module.
    """
    B, C, F, T = x.shape
    itemsize = jnp.dtype(x.dtype).itemsize
    use_affine = (weight is not None) or (bias is not None)

    tC, tT = _pick_tiles(B, C, F, T, itemsize, target_block_bytes)
    grid = (B, _cdiv(C, tC), _cdiv(T, tT))

    x_spec = pl.BlockSpec((1, tC, F, tT), lambda b, c, t: (b, c, 0, t))
    out_spec = pl.BlockSpec((1, tC, F, tT), lambda b, c, t: (b, c, 0, t))

    if use_affine:
        w4 = (jnp.ones((F,), jnp.float32) if weight is None
              else weight.astype(jnp.float32)).reshape(1, 1, F, 1)
        b4 = (jnp.zeros((F,), jnp.float32) if bias is None
              else bias.astype(jnp.float32)).reshape(1, 1, F, 1)
        kernel = _ln_over_f_affine_kernel
        in_specs = [
            x_spec,
            pl.BlockSpec((1, 1, F, 1), lambda b, c, t: (0, 0, 0, 0)),
            pl.BlockSpec((1, 1, F, 1), lambda b, c, t: (0, 0, 0, 0)),
        ]
        args = (x, w4, b4)
    else:
        kernel = _ln_over_f_kernel
        in_specs = [x_spec]
        args = (x,)

    # VMEM budget: double-buffered input + output blocks plus headroom for the
    # f32 intermediates of the (cast, center, square) chain.
    blk_elems = tC * F * tT
    vmem_limit = 2 * 2 * blk_elems * itemsize + 6 * blk_elems * 4 + (2 << 20)
    vmem_limit = int(min(max(vmem_limit, _VMEM_LIMIT_FLOOR), _VMEM_LIMIT_CAP))

    return pl.pallas_call(
        kernel,
        out_shape=jax.ShapeDtypeStruct((B, C, F, T), x.dtype),
        grid_spec=pltpu.PrefetchScalarGridSpec(
            num_scalar_prefetch=0,
            grid=grid,
            in_specs=in_specs,
            out_specs=out_spec,
        ),
        compiler_params=pltpu.CompilerParams(
            # All grid axes are independent -> fully parallel (feeds both
            # TensorCores on v7x; harmless on v5e/v6e).
            dimension_semantics=("parallel", "parallel", "parallel"),
            vmem_limit_bytes=vmem_limit,
        ),
    )(*args)


def _reference(x, weight=None, bias=None):
    F = x.shape[2]
    mean = jnp.mean(x, axis=2, keepdims=True)
    var = jnp.mean((x - mean) ** 2, axis=2, keepdims=True)
    y = (x - mean) / jnp.sqrt(var + EPS)
    if weight is not None:
        y = y * weight.reshape(1, 1, F, 1)
    if bias is not None:
        y = y + bias.reshape(1, 1, F, 1)
    return y


if __name__ == "__main__":
    key = jax.random.PRNGKey(0)
    k1, k2, k3, k4, k5 = jax.random.split(key, 5)

    # --- Case 1: the module's shapes/semantics (identity affine) -------------
    # Full (F, T) plane fits the block target -> block (1, 4, 16, 16), one
    # contiguous DMA per batch element.
    B, C, F, T = 2, 4, 16, 16
    x = jax.random.normal(k1, (B, C, F, T), dtype=jnp.float32)
    out = jax.block_until_ready(normalize(x))
    ref = _reference(x)
    assert out.shape == x.shape and out.dtype == x.dtype
    assert jnp.max(jnp.abs(out - ref)) < 2e-5

    # --- Case 2: ragged T handled in-kernel (no pad/slice) + affine ----------
    # Small target block forces the lane-dense T-tiling path: tT=128,
    # grid T steps = cdiv(300, 128) = 3 with a masked 44-wide edge block.
    B2, C2, F2, T2 = 2, 3, 24, 300
    x2 = jax.random.normal(k2, (B2, C2, F2, T2), dtype=jnp.float32)
    w2 = jax.random.normal(k3, (F2,), dtype=jnp.float32)
    b2 = jax.random.normal(k4, (F2,), dtype=jnp.float32)
    out2 = jax.block_until_ready(normalize(x2, w2, b2, target_block_bytes=16384))
    ref2 = _reference(x2, w2, b2)
    assert out2.shape == x2.shape and out2.dtype == x2.dtype
    assert jnp.max(jnp.abs(out2 - ref2)) < 2e-4

    # --- Case 3: ragged C folding (C=5 with tC=2 -> masked edge C block) -----
    B3, C3, F3, T3 = 2, 5, 16, 64
    x3 = jax.random.normal(k5, (B3, C3, F3, T3), dtype=jnp.float32)
    out3 = jax.block_until_ready(normalize(x3, target_block_bytes=10000))
    ref3 = _reference(x3)
    assert out3.shape == x3.shape and out3.dtype == x3.dtype
    assert jnp.max(jnp.abs(out3 - ref3)) < 2e-5

    print("KERNEL_OK")
</pallas_src>

<mosaic_0001>
module attributes {stable_mosaic.version = 11 : i64} {
  func.func @_ln_over_f_kernel(%arg0: i32, %arg1: i32, %arg2: i32, %arg3: memref<1x4x16x16xf32, #tpu.memory_space<vmem>>, %arg4: memref<1x4x16x16xf32, #tpu.memory_space<vmem>>) attributes {dimension_semantics = [#tpu.dimension_semantics<parallel>, #tpu.dimension_semantics<parallel>, #tpu.dimension_semantics<parallel>], iteration_bounds = array<i64: 2, 1, 1>, scalar_prefetch = 0 : i64, scratch_operands = 0 : i64, tpu.core_type = #tpu.core_type<tc>, window_params = [{transform_indices = @transform_0, window_bounds = array<i64: 1, 4, 16, 16>}, {transform_indices = @transform_1, window_bounds = array<i64: 1, 4, 16, 16>}]} {
    %c0 = arith.constant 0 : index
    %c0_0 = arith.constant 0 : index
    %c0_1 = arith.constant 0 : index
    %c0_2 = arith.constant 0 : index
    %0 = vector.load %arg3[%c0, %c0_0, %c0_1, %c0_2] : memref<1x4x16x16xf32, #tpu.memory_space<vmem>>, vector<1x4x16x16xf32>
    %cst = arith.constant dense<0.000000e+00> : vector<1x4x16xf32>
    %1 = vector.multi_reduction <add>, %0, %cst [2] : vector<1x4x16x16xf32> to vector<1x4x16xf32>
    %2 = vector.shape_cast %1 : vector<1x4x16xf32> to vector<1x4x1x16xf32>
    %cst_3 = arith.constant 1.600000e+01 : f32
    %3 = vector.broadcast %cst_3 : f32 to vector<1x4x1x16xf32>
    %4 = arith.divf %2, %3 : vector<1x4x1x16xf32>
    %5 = vector.broadcast %4 : vector<1x4x1x16xf32> to vector<1x4x16x16xf32>
    %6 = arith.subf %0, %5 : vector<1x4x16x16xf32>
    %7 = arith.mulf %6, %6 : vector<1x4x16x16xf32>
    %cst_4 = arith.constant dense<0.000000e+00> : vector<1x4x16xf32>
    %8 = vector.multi_reduction <add>, %7, %cst_4 [2] : vector<1x4x16x16xf32> to vector<1x4x16xf32>
    %9 = vector.shape_cast %8 : vector<1x4x16xf32> to vector<1x4x1x16xf32>
    %cst_5 = arith.constant 1.600000e+01 : f32
    %10 = vector.broadcast %cst_5 : f32 to vector<1x4x1x16xf32>
    %11 = arith.divf %9, %10 : vector<1x4x1x16xf32>
    %cst_6 = arith.constant 9.99999974E-6 : f32
    %12 = vector.broadcast %cst_6 : f32 to vector<1x4x1x16xf32>
    %13 = arith.addf %11, %12 : vector<1x4x1x16xf32>
    %14 = math.rsqrt %13 : vector<1x4x1x16xf32>
    %15 = vector.broadcast %14 : vector<1x4x1x16xf32> to vector<1x4x16x16xf32>
    %16 = arith.mulf %6, %15 : vector<1x4x16x16xf32>
    %c0_7 = arith.constant 0 : index
    %c0_8 = arith.constant 0 : index
    %c0_9 = arith.constant 0 : index
    %c0_10 = arith.constant 0 : index
    %17 = vector.load %arg4[%c0_7, %c0_8, %c0_9, %c0_10] : memref<1x4x16x16xf32, #tpu.memory_space<vmem>>, vector<1x4x16x16xf32>
    tpu.vector_store %arg4[%c0_7, %c0_8, %c0_9, %c0_10], %16 {strides = array<i32>} : memref<1x4x16x16xf32, #tpu.memory_space<vmem>>, vector<1x4x16x16xf32>,
    return
  }
  func.func @transform_0(%arg0: i32, %arg1: i32, %arg2: i32) -> (i32, i32, i32, i32) {
    %c0_i32 = arith.constant 0 : i32
    %c0_i32_0 = arith.constant 0 : i32
    return %arg0, %arg1, %c0_i32, %arg2 : i32, i32, i32, i32
  }
  func.func @transform_1(%arg0: i32, %arg1: i32, %arg2: i32) -> (i32, i32, i32, i32) {
    %c0_i32 = arith.constant 0 : i32
    %c0_i32_0 = arith.constant 0 : i32
    return %arg0, %arg1, %c0_i32, %arg2 : i32, i32, i32, i32
  }
}

</mosaic_0001>

<llo_original>
// kernel: tpu_custom_call.1
$region0: #{tpu_custom_call.1}
  #allocation0 [shape = 'u32[]', space=smem, size = 0x4, offset = 0x4, fixed_abs, tag = 'smem constant byte address 0x4 - core index']
  #allocation1 [shape = 'u32[72,128]{1,0:T(1,128)}', space=vmem, size = 0x9000, scoped, tag = 'internal scratch']
  %s0 = inlined_call_operand.hbm [shape: f32[2,4,16,16], index: 0, kind: input, shape index: {}]
  %s1 = inlined_call_operand.hbm [shape: f32[2,4,16,16], index: 1, kind: output, shape index: {}]
  %s2 = sld [smem:[#allocation0]]
  $region41: #{tpu_custom_call.1} parent=0
    _
  %s4 = ssub.s32 1, %s2
  %s5 = scalar_select 0, %s4, %s2
  $region1: #{tpu_custom_call.1} parent=0
    #allocation2 [shape = 'u8[65536]{0}', space=vmem, size = 0x10000, scoped, tag = 'input window, operand 0']
    #allocation3 [shape = 's32[2]{0}', space=sflag, size = 0x8, scoped, tag = 'scoped memory for tpu_custom_call.1']
    #allocation4 [shape = 's32[2]{0}', space=sflag, size = 0x8, scoped, tag = 'scoped memory for tpu_custom_call.1']
    #allocation5 [shape = 'u8[65536]{0}', space=vmem, size = 0x10000, scoped, tag = 'output window, operand 0']
    %6 = vsyncpa [#allocation3], 0
    %s7 = scalar_lea.sflag [#allocation3], 1
    %8 = vsyncpa %s7, 0
    %9 = vsyncpa [#allocation4], 0
    %s10 = scalar_lea.sflag [#allocation4], 1
    %11 = vsyncpa %s10, 0
    loop: start=0, step=1, limit=4
    $region2: #{tpu_custom_call.1} parent=1 // loop_pre_header
      _
    $region3: #{tpu_custom_call.1} parent=1 // loop_header
      %s13 = sphi 0, %s17
      %p14 = scmp.ge.s32.totalorder %s13, 4
      %s20 = sphi 0, %s39
      %s21 = sphi 0, %s35
      %s22 = sphi 0, %s31
      %s23 = sphi 0, %s20
      %s24 = sphi 0, %s21
      %s25 = sphi 0, %s22
      %s26 = sphi 0, %s23
      %s27 = sphi 0, %s24
      %s28 = sphi 0, %s25
      %s46 = sphi 0, %s48
      %s49 = sphi 0, %s46
      %s50 = sphi 0, %s49
      %s66 = sphi 0, %s50
      %s76 = sphi 0, %s78
      %s79 = sphi 0, %s76
      %s80 = sphi 0, %s79
      %s96 = sphi 0, %s80
    $region4: #{tpu_custom_call.1} parent=1 // loop_header_branch
      %16 = sbr.rel (%p14) target = $region8
    $region5: #{tpu_custom_call.1} parent=1 // loop_body
      %s18 = ssub.s32 %s13, 1
      %s19 = ssub.s32 %s13, 2
      %s29 = sadd.s32 1, %s22
      %p30 = scmp.ge.s32.totalorder %s29, 1
      %s31 = scalar_select %p30, 0, %s29
      %s32 = sadd.s32 1, %s21
      %s33 = scalar_select %p30, %s32, %s21
      %p34 = scmp.ge.s32.totalorder %s33, 1
      %s35 = scalar_select %p34, 0, %s33
      %s36 = sadd.s32 1, %s20
      %s37 = scalar_select %p34, %s36, %s20
      %p38 = scmp.ge.s32.totalorder %s37, 2
      %s39 = scalar_select %p38, 0, %s37
      %s40 = ssub.s32 %s20, %s39
      %s41 = ssub.s32 %s21, %s35
      %s42 = sor.u32 %s40, %s41
      %s43 = ssub.s32 %s22, %s31
      %s44 = sor.u32 %s42, %s43
      %p45 = scmp.eq.s32.totalorder %s44, 0
      %s47 = sadd.s32 %s46, 1
      %s48 = scalar_select %p45, %s46, %s47
      %p51 = pneg %p45
      %p52 = scmp.eq.s32.totalorder %s13, 1
      %p53 = por %p51, %p52
      %p54 = scmp.ne.s32.totalorder %s46, %s49
      %p55 = scmp.eq.s32.totalorder %s13, 0
      %p56 = por %p54, %p55
      %p57 = scmp.ne.s32.totalorder %s46, %s49
      %p58 = scmp.eq.s32.totalorder %s18, 1
      %p59 = por %p57, %p58
      %p60 = scmp.ne.s32.totalorder %s49, %s50
      %p61 = scmp.eq.s32.totalorder %s18, 0
      %p62 = por %p60, %p61
      %p63 = scmp.ne.s32.totalorder %s49, %s50
      %p64 = scmp.eq.s32.totalorder %s19, 1
      %p65 = por %p63, %p64
      %p67 = scmp.ne.s32.totalorder %s50, %s66
      %p68 = scmp.eq.s32.totalorder %s19, 0
      %p69 = por %p67, %p68
      %s70 = ssub.s32 %s20, %s39
      %s71 = ssub.s32 %s21, %s35
      %s72 = sor.u32 %s70, %s71
      %s73 = ssub.s32 %s22, %s31
      %s74 = sor.u32 %s72, %s73
      %p75 = scmp.eq.s32.totalorder %s74, 0
      %s77 = sadd.s32 %s76, 1
      %s78 = scalar_select %p75, %s76, %s77
      %p81 = pneg %p75
      %p82 = scmp.eq.s32.totalorder %s13, 1
      %p83 = por %p81, %p82
      %p84 = scmp.ne.s32.totalorder %s76, %s79
      %p85 = scmp.eq.s32.totalorder %s13, 0
      %p86 = por %p84, %p85
      %p87 = scmp.ne.s32.totalorder %s76, %s79
      %p88 = scmp.eq.s32.totalorder %s18, 1
      %p89 = por %p87, %p88
      %p90 = scmp.ne.s32.totalorder %s79, %s80
      %p91 = scmp.eq.s32.totalorder %s18, 0
      %p92 = por %p90, %p91
      %p93 = scmp.ne.s32.totalorder %s79, %s80
      %p94 = scmp.eq.s32.totalorder %s19, 1
      %p95 = por %p93, %p94
      %p97 = scmp.ne.s32.totalorder %s80, %s96
      %p98 = scmp.eq.s32.totalorder %s19, 0
      %p99 = por %p97, %p98
      %p100 = scmp.le.s32.totalorder 1, %s13
      %p101 = scmp.lt.s32.totalorder %s13, 3
      %p102 = pnand %p100, %p101
      %p103 = pneg %p102
      // Predicated region
      $region9: #{tpu_custom_call.1} parent=5 // pred_check
        _
      $region10: #{tpu_custom_call.1} parent=5 // pred_check_branch
        %105 = sbr.rel (%p102) target = $region12
      $region11: #{tpu_custom_call.1} parent=5 // pred_region
        %s106 = ssub.s32 %s13, 1
      $region12: #{tpu_custom_call.1} parent=5 // pred_fallthru
        _
      %p107 = scmp.lt.s32.totalorder %s13, 2
      // Predicated region
      $region13: #{tpu_custom_call.1} parent=5 // pred_check
        %p108 = pneg %p107
      $region14: #{tpu_custom_call.1} parent=5 // pred_check_branch
        %110 = sbr.rel (%p108) target = $region16
      $region15: #{tpu_custom_call.1} parent=5 // pred_region
        // Predicated region
        $region17: #{tpu_custom_call.1} parent=15 // pred_check
          %p111 = pneg %p56
        $region18: #{tpu_custom_call.1} parent=15 // pred_check_branch
          %113 = sbr.rel (%p111) target = $region20
        $region19: #{tpu_custom_call.1} parent=15 // pred_region
          %s114 = sand.u32 %s46, 1
          %s115 = scalar_lea.sflag [#allocation3], %s114
          %s116 = sand.u32 %s46, 1
          %s117 = smul.addr %s116, 64
          %s118 = scalar_lea.vmem [#allocation2], %s117
          %s119 = smul.u32 4, %s21
          %121 = vsyncadd %s115, 0
          %s122 = smul.addr %s119, 2
          %s123 = sadd.s32 %s22, %s122
          %s124 = smul.addr %s20, 8
          %s125 = sadd.s32 %s123, %s124
          %s126 = smul.addr %s125, 8
          %s127 = scalar_lea.hbm %s0, %s126
          %s128 = sshll.u32 %s127, 4
          %s129 = int_to_ptr.hbm [resolvable:$true] %s128
          %s130 = sshll.u32 %s118, 4
          %s131 = int_to_ptr.vmem [resolvable:$true] %s130
          %136 = dma.hbm_to_vmem [thread:$0]  %s129, 1024, %s131, %s115, 128, 128, 8
        $region20: #{tpu_custom_call.1} parent=15 // pred_fallthru
          _
      $region16: #{tpu_custom_call.1} parent=5 // pred_fallthru
        _
      %p137 = scmp.le.s32.totalorder 1, %s13
      %p138 = scmp.lt.s32.totalorder %s13, 3
      %p139 = pnand %p137, %p138
      %p140 = pneg %p139
      // Predicated region
      $region21: #{tpu_custom_call.1} parent=5 // pred_check
        _
      $region22: #{tpu_custom_call.1} parent=5 // pred_check_branch
        %142 = sbr.rel (%p139) target = $region24
      $region23: #{tpu_custom_call.1} parent=5 // pred_region
        %s143 = ssub.s32 %s13, 1
        %s144 = sand.u32 %s49, 1
        %s145 = scalar_lea.sflag [#allocation3], %s144
        %s146 = sand.u32 %s49, 1
        %s147 = smul.addr %s146, 64
        %s148 = scalar_lea.vmem [#allocation2], %s147
        // Predicated region
        $region25: #{tpu_custom_call.1} parent=23 // pred_check
          %p149 = pneg %p62
        $region26: #{tpu_custom_call.1} parent=23 // pred_check_branch
          %151 = sbr.rel (%p149) target = $region28
        $region27: #{tpu_custom_call.1} parent=23 // pred_region
          %153 = dma.done %s145, 1024
        $region28: #{tpu_custom_call.1} parent=23 // pred_fallthru
          _
        %s154 = sand.u32 %s49, 1
        %s155 = scalar_lea.sflag [#allocation3], %s154
        %s156 = sand.u32 %s49, 1
        %s157 = smul.addr %s156, 64
        %s158 = scalar_lea.vmem [#allocation2], %s157
        %p159 = pneg %p62
        %p160 = pneg %p59
        %p161 = pneg %p92
        %p162 = pneg %p89
        %s163 = sand.u32 %s79, 1
        %s164 = scalar_lea.sflag [#allocation4], %s163
        %s165 = sand.u32 %s79, 1
        %s166 = smul.addr %s165, 64
        %s167 = scalar_lea.vmem [#allocation5], %s166
        %s168 = smul.u32 4, %s24
        %s169 = smul.u32 4, %s24
        %v170 = vld [vmem:[%s148] sm:$0xff]
        %v171 = vld [vmem:[%s148 + $0x8] sm:$0xff]
        %v172 = vld [vmem:[%s148 + $0x10] sm:$0xff]
        %v173 = vld [vmem:[%s148 + $0x18] sm:$0xff]
        %v174 = vld [vmem:[%s148 + $0x20] sm:$0xff]
        %v175 = vld [vmem:[%s148 + $0x28] sm:$0xff]
        %v176 = vld [vmem:[%s148 + $0x30] sm:$0xff]
        %v177 = vld [vmem:[%s148 + $0x38] sm:$0xff]
        %vm178 = vcmask 130048
        %v179 = vsel %vm178, %v170, 0.0
        %v180 = vsel %vm178, %v171, 0.0
        %v181 = vadd.f32 %v179, %v180
        %v182 = vrot.slane %v181, 4
        %v183 = vadd.f32 %v181, %v182
        %v184 = vrot.slane %v183, 2
        %v185 = vadd.f32 %v183, %v184
        %v186 = vrot.slane %v185, 1
        %v187 = vadd.f32 %v185, %v186
        %v188 = vsel %vm178, %v172, 0.0
        %v189 = vsel %vm178, %v173, 0.0
        %v190 = vadd.f32 %v188, %v189
        %v191 = vrot.slane %v190, 4
        %v192 = vadd.f32 %v190, %v191
        %v193 = vrot.slane %v192, 2
        %v194 = vadd.f32 %v192, %v193
        %v195 = vrot.slane %v194, 1
        %v196 = vadd.f32 %v194, %v195
        %v197 = vsel %vm178, %v174, 0.0
        %v198 = vsel %vm178, %v175, 0.0
        %v199 = vadd.f32 %v197, %v198
        %v200 = vrot.slane %v199, 4
        %v201 = vadd.f32 %v199, %v200
        %v202 = vrot.slane %v201, 2
        %v203 = vadd.f32 %v201, %v202
        %v204 = vrot.slane %v203, 1
        %v205 = vadd.f32 %v203, %v204
        %v206 = vsel %vm178, %v176, 0.0
        %v207 = vsel %vm178, %v177, 0.0
        %v208 = vadd.f32 %v206, %v207
        %v209 = vrot.slane %v208, 4
        %v210 = vadd.f32 %v208, %v209
        %v211 = vrot.slane %v210, 2
        %v212 = vadd.f32 %v210, %v211
        %v213 = vrot.slane %v212, 1
        %v214 = vadd.f32 %v212, %v213
        %v215 = vrcp.pop 16.0
        %v216 = vmul.f32 16.0, %v215
        %v217 = vsub.f32 1.0, %v216
        %v218 = vmul.f32 %v215, %v217
        %v219 = vadd.f32 %v215, %v218
        %vm220 = vweird.f32 %v215
        %v221 = vsel %vm220, %v215, %v219
        %v222 = vmul.f32 %v187, %v221
        %v223 = vmul.f32 %v196, %v221
        %v224 = vmul.f32 %v205, %v221
        %v225 = vmul.f32 %v214, %v221
        %v226 = vsub.f32 %v170, %v222
        %v227 = vsub.f32 %v171, %v222
        %v228 = vsub.f32 %v172, %v223
        %v229 = vsub.f32 %v173, %v223
        %v230 = vsub.f32 %v174, %v224
        %v231 = vsub.f32 %v175, %v224
        %v232 = vsub.f32 %v176, %v225
        %v233 = vsub.f32 %v177, %v225
        %v234 = vmul.f32 %v226, %v226
        %v235 = vmul.f32 %v227, %v227
        %v236 = vmul.f32 %v228, %v228
        %v237 = vmul.f32 %v229, %v229
        %v238 = vmul.f32 %v230, %v230
        %v239 = vmul.f32 %v231, %v231
        %v240 = vmul.f32 %v232, %v232
        %v241 = vmul.f32 %v233, %v233
        %v242 = vsel %vm178, %v234, 0.0
        %v243 = vsel %vm178, %v235, 0.0
        %v244 = vadd.f32 %v242, %v243
        %v245 = vrot.slane %v244, 4
        %v246 = vadd.f32 %v244, %v245
        %v247 = vrot.slane %v246, 2
        %v248 = vadd.f32 %v246, %v247
        %v249 = vrot.slane %v248, 1
        %v250 = vadd.f32 %v248, %v249
        %v251 = vsel %vm178, %v236, 0.0
        %v252 = vsel %vm178, %v237, 0.0
        %v253 = vadd.f32 %v251, %v252
        %v254 = vrot.slane %v253, 4
        %v255 = vadd.f32 %v253, %v254
        %v256 = vrot.slane %v255, 2
        %v257 = vadd.f32 %v255, %v256
        %v258 = vrot.slane %v257, 1
        %v259 = vadd.f32 %v257, %v258
        %v260 = vsel %vm178, %v238, 0.0
        %v261 = vsel %vm178, %v239, 0.0
        %v262 = vadd.f32 %v260, %v261
        %v263 = vrot.slane %v262, 4
        %v264 = vadd.f32 %v262, %v263
        %v265 = vrot.slane %v264, 2
        %v266 = vadd.f32 %v264, %v265
        %v267 = vrot.slane %v266, 1
        %v268 = vadd.f32 %v266, %v267
        %v269 = vsel %vm178, %v240, 0.0
        %v270 = vsel %vm178, %v241, 0.0
        %v271 = vadd.f32 %v269, %v270
        %v272 = vrot.slane %v271, 4
        %v273 = vadd.f32 %v271, %v272
        %v274 = vrot.slane %v273, 2
        %v275 = vadd.f32 %v273, %v274
        %v276 = vrot.slane %v275, 1
        %v277 = vadd.f32 %v275, %v276
        %v278 = vmul.f32 %v250, %v221
        %v279 = vmul.f32 %v259, %v221
        %v280 = vmul.f32 %v268, %v221
        %v281 = vmul.f32 %v277, %v221
        %v282 = vadd.f32 %v278, 1e-05
        %v283 = vadd.f32 %v279, 1e-05
        %v284 = vadd.f32 %v280, 1e-05
        %v285 = vadd.f32 %v281, 1e-05
        %v286 = vrsqrt.pop %v282
        %v287 = vmul.f32 %v286, %v282
        %v288 = vmul.f32 %v287, %v286
        %v289 = vmul.f32 0.5, %v288
        %v290 = vsub.f32 1.5, %v289
        %v291 = vmul.f32 %v286, %v290
        %vm292 = vweird.f32 %v282
        %vm293 = vweird.f32 %v286
        %vm294 = vmor %vm292, %vm293
        %v295 = vsel %vm294, %v286, %v291
        %v296 = vrsqrt.pop %v283
        %v297 = vmul.f32 %v296, %v283
        %v298 = vmul.f32 %v297, %v296
        %v299 = vmul.f32 0.5, %v298
        %v300 = vsub.f32 1.5, %v299
        %v301 = vmul.f32 %v296, %v300
        %vm302 = vweird.f32 %v283
        %vm303 = vweird.f32 %v296
        %vm304 = vmor %vm302, %vm303
        %v305 = vsel %vm304, %v296, %v301
        %v306 = vrsqrt.pop %v284
        %v307 = vmul.f32 %v306, %v284
        %v308 = vmul.f32 %v307, %v306
        %v309 = vmul.f32 0.5, %v308
        %v310 = vsub.f32 1.5, %v309
        %v311 = vmul.f32 %v306, %v310
        %vm312 = vweird.f32 %v284
        %vm313 = vweird.f32 %v306
        %vm314 = vmor %vm312, %vm313
        %v315 = vsel %vm314, %v306, %v311
        %v316 = vrsqrt.pop %v285
        %v317 = vmul.f32 %v316, %v285
        %v318 = vmul.f32 %v317, %v316
        %v319 = vmul.f32 0.5, %v318
        %v320 = vsub.f32 1.5, %v319
        %v321 = vmul.f32 %v316, %v320
        %vm322 = vweird.f32 %v285
        %vm323 = vweird.f32 %v316
        %vm324 = vmor %vm322, %vm323
        %v325 = vsel %vm324, %v316, %v321
        %v326 = vmul.f32 %v226, %v295
        %v327 = vmul.f32 %v227, %v295
        %v328 = vmul.f32 %v228, %v305
        %v329 = vmul.f32 %v229, %v305
        %v330 = vmul.f32 %v230, %v315
        %v331 = vmul.f32 %v231, %v315
        %v332 = vmul.f32 %v232, %v325
        %v333 = vmul.f32 %v233, %v325
        %334 = vst.msk [vmem:[%s167] sm:$0xff] %vm178, %v326
        %335 = vst.msk [vmem:[%s167 + $0x8] sm:$0xff] %vm178, %v327
        %336 = vst.msk [vmem:[%s167 + $0x10] sm:$0xff] %vm178, %v328
        %337 = vst.msk [vmem:[%s167 + $0x18] sm:$0xff] %vm178, %v329
        %338 = vst.msk [vmem:[%s167 + $0x20] sm:$0xff] %vm178, %v330
        %339 = vst.msk [vmem:[%s167 + $0x28] sm:$0xff] %vm178, %v331
        %340 = vst.msk [vmem:[%s167 + $0x30] sm:$0xff] %vm178, %v332
        %341 = vst.msk [vmem:[%s167 + $0x38] sm:$0xff] %vm178, %v333
        %s342 = sand.u32 %s79, 1
        %s343 = scalar_lea.sflag [#allocation4], %s342
        %s344 = sand.u32 %s79, 1
        %s345 = smul.addr %s344, 64
        %s346 = scalar_lea.vmem [#allocation5], %s345
        // Predicated region
        $region29: #{tpu_custom_call.1} parent=23 // pred_check
          %p347 = pneg %p89
        $region30: #{tpu_custom_call.1} parent=23 // pred_check_branch
          %349 = sbr.rel (%p347) target = $region32
        $region31: #{tpu_custom_call.1} parent=23 // pred_region
          %s350 = smul.u32 4, %s24
          %352 = vsyncadd %s343, 0
          %s353 = smul.addr %s350, 2
          %s354 = sadd.s32 %s25, %s353
          %s355 = smul.addr %s23, 8
          %s356 = sadd.s32 %s354, %s355
          %s357 = smul.addr %s356, 8
          %s358 = scalar_lea.hbm %s1, %s357
          %s359 = sshll.u32 %s346, 4
          %s360 = int_to_ptr.vmem [resolvable:$true] %s359
          %s361 = sshll.u32 %s358, 4
          %s362 = int_to_ptr.hbm [resolvable:$true] %s361
          %367 = dma.vmem_to_hbm [thread:$0]  %s360, 1024, %s362, %s343, 128, 128, 8
        $region32: #{tpu_custom_call.1} parent=23 // pred_fallthru
          _
      $region24: #{tpu_custom_call.1} parent=5 // pred_fallthru
        _
      %p368 = scmp.le.s32.totalorder 2, %s13
      // Predicated region
      $region33: #{tpu_custom_call.1} parent=5 // pred_check
        %p369 = pneg %p368
      $region34: #{tpu_custom_call.1} parent=5 // pred_check_branch
        %371 = sbr.rel (%p369) target = $region36
      $region35: #{tpu_custom_call.1} parent=5 // pred_region
        %s372 = ssub.s32 %s13, 2
        // Predicated region
        $region37: #{tpu_custom_call.1} parent=35 // pred_check
          %p373 = pneg %p95
        $region38: #{tpu_custom_call.1} parent=35 // pred_check_branch
          %375 = sbr.rel (%p373) target = $region40
        $region39: #{tpu_custom_call.1} parent=35 // pred_region
          %s376 = sand.u32 %s80, 1
          %s377 = scalar_lea.sflag [#allocation4], %s376
          %s378 = sand.u32 %s80, 1
          %s379 = smul.addr %s378, 64
          %s380 = scalar_lea.vmem [#allocation5], %s379
          %382 = dma.done %s377, 1024
        $region40: #{tpu_custom_call.1} parent=35 // pred_fallthru
          _
      $region36: #{tpu_custom_call.1} parent=5 // pred_fallthru
        _
    $region6: #{tpu_custom_call.1} parent=1 // loop_footer
      %s17 = sadd.s32 1, %s13
    $region7: #{tpu_custom_call.1} parent=1 // loop_footer_branch
      %12 = sbr.rel target = $region3
    $region8: #{tpu_custom_call.1} parent=1 // loop_exit
      _
    %383 = vsyncpa [#allocation3], 1
    %s384 = scalar_lea.sflag [#allocation3], 1
    %385 = vsyncpa %s384, 1
    %386 = vsyncpa [#allocation4], 1
    %s387 = scalar_lea.sflag [#allocation4], 1
    %388 = vsyncpa %s387, 1

</llo_original>
